<compile_context>
chip_gen: v6e
topology: v6e:2x2x1
jax: 0.10.0
libtpu: 0.0.40
codegen_flags: <defaults>
</compile_context>

<pallas_src>
import numpy as np
import jax
import jax.numpy as jnp
from jax.experimental import pallas as pl
from jax.experimental.pallas import tpu as pltpu


def _round_up(x, m):
    return ((x + m - 1) // m) * m


# ----------------------------------------------------------------------------
# Pallas kernel: one (TM, C) row tile per grid step, weights VMEM-resident.
# ----------------------------------------------------------------------------
def _transition_kernel(s_ref, w1_ref, b1_ref, w2_ref, b2_ref, w3_ref, b3_ref,
                       o_ref):
    # Block shapes:
    #   s_ref : (TM, C)  input dtype      o_ref : (TM, C)  input dtype
    #   w*_ref: (C, C)   bf16             b*_ref: (1, C)   f32
    s = s_ref[...]
    s_f32 = s.astype(jnp.float32)

    # Layer 1: bf16 MXU operands, f32 accumulation; bias + ReLU in f32 (VPU).
    h = jnp.dot(s.astype(jnp.bfloat16), w1_ref[...],
                preferred_element_type=jnp.float32)
    h = jnp.maximum(h + b1_ref[...], 0.0)

    # Layer 2.
    h = jnp.dot(h.astype(jnp.bfloat16), w2_ref[...],
                preferred_element_type=jnp.float32)
    h = jnp.maximum(h + b2_ref[...], 0.0)

    # Layer 3 (no ReLU) + residual.
    h = jnp.dot(h.astype(jnp.bfloat16), w3_ref[...],
                preferred_element_type=jnp.float32)
    h = h + b3_ref[...]

    o_ref[...] = (h + s_f32).astype(o_ref.dtype)


# ----------------------------------------------------------------------------
# Wrapper: flatten leading dims -> row tiles, cdiv grid (no pad/slice).
# ----------------------------------------------------------------------------
def structure_module_transition_layer(s, params, *, tm=1024):
    """Fused Pallas forward of StructureModuleTransitionLayer.

    s: (..., C) activations. params: dict with w1,b1,w2,b2,w3,b3 where
    w* have shape (C, C) (input-major, i.e. y = x @ w + b) and b* shape (C,).
    """
    w1, b1 = params["w1"], params["b1"]
    w2, b2 = params["w2"], params["b2"]
    w3, b3 = params["w3"], params["b3"]

    orig_shape = s.shape
    c = orig_shape[-1]
    assert w1.shape == (c, c) and w2.shape == (c, c) and w3.shape == (c, c)

    rows = int(np.prod(orig_shape[:-1])) if len(orig_shape) > 1 else 1
    s2 = s.reshape(rows, c)

    # Weights are tiny (3 * C*C): pre-cast once to bf16 so the MXU gets native
    # operands and the resident weight blocks take half the VMEM.
    w1b = w1.astype(jnp.bfloat16)
    w2b = w2.astype(jnp.bfloat16)
    w3b = w3.astype(jnp.bfloat16)
    b1r = b1.astype(jnp.float32).reshape(1, c)
    b2r = b2.astype(jnp.float32).reshape(1, c)
    b3r = b3.astype(jnp.float32).reshape(1, c)

    # Row tile: multiple of 16 sublanes; capped so that the grid has >= 2 steps
    # whenever the row count allows (keeps both v7x TensorCores fed), and never
    # larger than the (16-rounded) row count.
    half_rows = _round_up(pl.cdiv(rows, 2), 16)
    tm = max(16, min(tm, half_rows, _round_up(rows, 16)))
    grid = (pl.cdiv(rows, tm),)

    out = pl.pallas_call(
        _transition_kernel,
        out_shape=jax.ShapeDtypeStruct((rows, c), s.dtype),
        grid_spec=pltpu.PrefetchScalarGridSpec(
            num_scalar_prefetch=0,
            grid=grid,
            in_specs=[
                pl.BlockSpec((tm, c), lambda i: (i, 0)),   # activation row tile
                pl.BlockSpec((c, c), lambda i: (0, 0)),    # w1 (resident)
                pl.BlockSpec((1, c), lambda i: (0, 0)),    # b1
                pl.BlockSpec((c, c), lambda i: (0, 0)),    # w2
                pl.BlockSpec((1, c), lambda i: (0, 0)),    # b2
                pl.BlockSpec((c, c), lambda i: (0, 0)),    # w3
                pl.BlockSpec((1, c), lambda i: (0, 0)),    # b3
            ],
            out_specs=pl.BlockSpec((tm, c), lambda i: (i, 0)),
        ),
        compiler_params=pltpu.CompilerParams(
            dimension_semantics=("parallel",),
        ),
    )(s2, w1b, b1r, w2b, b2r, w3b, b3r)

    return out.reshape(orig_shape)


# ----------------------------------------------------------------------------
# Parameter init (matches PyTorch Linear math: y = x @ W_in_major + b)
# ----------------------------------------------------------------------------
def init_params(key, c):
    ks = jax.random.split(key, 6)
    he = float(np.sqrt(2.0 / c))
    # linear_1 / linear_2: init='relu' (He). linear_3: init='final' is zeros in
    # the original code; use small random here so the numeric check is non-trivial.
    w1 = jax.random.normal(ks[0], (c, c), jnp.float32) * he
    w2 = jax.random.normal(ks[1], (c, c), jnp.float32) * he
    w3 = jax.random.normal(ks[2], (c, c), jnp.float32) * 0.02
    b1 = jax.random.normal(ks[3], (c,), jnp.float32) * 0.01
    b2 = jax.random.normal(ks[4], (c,), jnp.float32) * 0.01
    b3 = jax.random.normal(ks[5], (c,), jnp.float32) * 0.01
    return {"w1": w1, "b1": b1, "w2": w2, "b2": b2, "w3": w3, "b3": b3}


def reference_forward_f32(s, params):
    """Pure f32 JAX reference mirroring the PyTorch forward."""
    h = jnp.maximum(s @ params["w1"] + params["b1"], 0.0)
    h = jnp.maximum(h @ params["w2"] + params["b2"], 0.0)
    h = h @ params["w3"] + params["b3"]
    return h + s


def reference_forward_matched(s, params):
    """Reference mirroring the kernel precision: bf16 MXU operands, f32 accum."""
    bf = jnp.bfloat16
    h = jnp.dot(s.astype(bf), params["w1"].astype(bf),
                preferred_element_type=jnp.float32) + params["b1"]
    h = jnp.maximum(h, 0.0)
    h = jnp.dot(h.astype(bf), params["w2"].astype(bf),
                preferred_element_type=jnp.float32) + params["b2"]
    h = jnp.maximum(h, 0.0)
    h = jnp.dot(h.astype(bf), params["w3"].astype(bf),
                preferred_element_type=jnp.float32) + params["b3"]
    return (h + s).astype(s.dtype)


if __name__ == "__main__":
    key = jax.random.PRNGKey(0)
    k_s, k_p = jax.random.split(key)

    # Small but representative shapes: (batch, n_res, c) with lane-aligned c.
    # rows = 40 -> grid of 2 steps with a partial last block (exercises the
    # cdiv-grid path that replaced the pad/slice round-trips).
    B, N_RES, C = 2, 20, 128
    s = jax.random.normal(k_s, (B, N_RES, C), jnp.float32)
    params = init_params(k_p, C)

    out = structure_module_transition_layer(s, params)
    out = jax.block_until_ready(out)

    assert out.shape == s.shape
    # Tight check against a reference with identical precision semantics.
    ref_matched = reference_forward_matched(s, params)
    assert jnp.allclose(out, ref_matched, atol=1e-3, rtol=1e-3)
    # Loose check against the strict f32 PyTorch-equivalent math.
    ref_f32 = reference_forward_f32(s, params)
    assert jnp.allclose(out, ref_f32, atol=5e-2, rtol=5e-2)

    print("KERNEL_OK")
</pallas_src>

<mosaic_0001>
module attributes {stable_mosaic.version = 11 : i64} {
  func.func @_transition_kernel(%arg0: i32, %arg1: memref<32x128xf32, #tpu.memory_space<vmem>>, %arg2: memref<128x128xbf16, #tpu.memory_space<vmem>>, %arg3: memref<1x128xf32, #tpu.memory_space<vmem>>, %arg4: memref<128x128xbf16, #tpu.memory_space<vmem>>, %arg5: memref<1x128xf32, #tpu.memory_space<vmem>>, %arg6: memref<128x128xbf16, #tpu.memory_space<vmem>>, %arg7: memref<1x128xf32, #tpu.memory_space<vmem>>, %arg8: memref<32x128xf32, #tpu.memory_space<vmem>>) attributes {dimension_semantics = [#tpu.dimension_semantics<parallel>], iteration_bounds = array<i64: 2>, scalar_prefetch = 0 : i64, scratch_operands = 0 : i64, tpu.core_type = #tpu.core_type<tc>, window_params = [{transform_indices = @transform_0, window_bounds = array<i64: 32, 128>}, {pipeline_mode = #tpu.pipeline_mode<synchronous>, transform_indices = @transform_1, window_bounds = array<i64: 128, 128>}, {pipeline_mode = #tpu.pipeline_mode<synchronous>, transform_indices = @transform_2, window_bounds = array<i64: 1, 128>}, {pipeline_mode = #tpu.pipeline_mode<synchronous>, transform_indices = @transform_3, window_bounds = array<i64: 128, 128>}, {pipeline_mode = #tpu.pipeline_mode<synchronous>, transform_indices = @transform_4, window_bounds = array<i64: 1, 128>}, {pipeline_mode = #tpu.pipeline_mode<synchronous>, transform_indices = @transform_5, window_bounds = array<i64: 128, 128>}, {pipeline_mode = #tpu.pipeline_mode<synchronous>, transform_indices = @transform_6, window_bounds = array<i64: 1, 128>}, {transform_indices = @transform_7, window_bounds = array<i64: 32, 128>}]} {
    %c0 = arith.constant 0 : index
    %c0_0 = arith.constant 0 : index
    %0 = vector.load %arg1[%c0, %c0_0] : memref<32x128xf32, #tpu.memory_space<vmem>>, vector<32x128xf32>
    %1 = arith.truncf %0 : vector<32x128xf32> to vector<32x128xbf16>
    %c0_1 = arith.constant 0 : index
    %c0_2 = arith.constant 0 : index
    %2 = vector.load %arg2[%c0_1, %c0_2] : memref<128x128xbf16, #tpu.memory_space<vmem>>, vector<128x128xbf16>
    %cst = arith.constant dense<0.000000e+00> : vector<32x128xf32>
    %3 = tpu.matmul %1, %2, %cst {dimension_numbers = #tpu.dot_dimension_numbers<[1], [0], [0], [1], [0, 0, 1, 1], [], []>} : vector<32x128xbf16>, vector<128x128xbf16>, vector<32x128xf32> -> vector<32x128xf32>
    %c0_3 = arith.constant 0 : index
    %c0_4 = arith.constant 0 : index
    %4 = vector.load %arg3[%c0_3, %c0_4] : memref<1x128xf32, #tpu.memory_space<vmem>>, vector<1x128xf32>
    %5 = vector.broadcast %4 : vector<1x128xf32> to vector<32x128xf32>
    %6 = arith.addf %3, %5 : vector<32x128xf32>
    %cst_5 = arith.constant 0.000000e+00 : f32
    %7 = vector.broadcast %cst_5 : f32 to vector<32x128xf32>
    %8 = arith.maximumf %6, %7 : vector<32x128xf32>
    %9 = arith.truncf %8 : vector<32x128xf32> to vector<32x128xbf16>
    %c0_6 = arith.constant 0 : index
    %c0_7 = arith.constant 0 : index
    %10 = vector.load %arg4[%c0_6, %c0_7] : memref<128x128xbf16, #tpu.memory_space<vmem>>, vector<128x128xbf16>
    %cst_8 = arith.constant dense<0.000000e+00> : vector<32x128xf32>
    %11 = tpu.matmul %9, %10, %cst_8 {dimension_numbers = #tpu.dot_dimension_numbers<[1], [0], [0], [1], [0, 0, 1, 1], [], []>} : vector<32x128xbf16>, vector<128x128xbf16>, vector<32x128xf32> -> vector<32x128xf32>
    %c0_9 = arith.constant 0 : index
    %c0_10 = arith.constant 0 : index
    %12 = vector.load %arg5[%c0_9, %c0_10] : memref<1x128xf32, #tpu.memory_space<vmem>>, vector<1x128xf32>
    %13 = vector.broadcast %12 : vector<1x128xf32> to vector<32x128xf32>
    %14 = arith.addf %11, %13 : vector<32x128xf32>
    %cst_11 = arith.constant 0.000000e+00 : f32
    %15 = vector.broadcast %cst_11 : f32 to vector<32x128xf32>
    %16 = arith.maximumf %14, %15 : vector<32x128xf32>
    %17 = arith.truncf %16 : vector<32x128xf32> to vector<32x128xbf16>
    %c0_12 = arith.constant 0 : index
    %c0_13 = arith.constant 0 : index
    %18 = vector.load %arg6[%c0_12, %c0_13] : memref<128x128xbf16, #tpu.memory_space<vmem>>, vector<128x128xbf16>
    %cst_14 = arith.constant dense<0.000000e+00> : vector<32x128xf32>
    %19 = tpu.matmul %17, %18, %cst_14 {dimension_numbers = #tpu.dot_dimension_numbers<[1], [0], [0], [1], [0, 0, 1, 1], [], []>} : vector<32x128xbf16>, vector<128x128xbf16>, vector<32x128xf32> -> vector<32x128xf32>
    %c0_15 = arith.constant 0 : index
    %c0_16 = arith.constant 0 : index
    %20 = vector.load %arg7[%c0_15, %c0_16] : memref<1x128xf32, #tpu.memory_space<vmem>>, vector<1x128xf32>
    %21 = vector.broadcast %20 : vector<1x128xf32> to vector<32x128xf32>
    %22 = arith.addf %19, %21 : vector<32x128xf32>
    %23 = arith.addf %22, %0 : vector<32x128xf32>
    %c0_17 = arith.constant 0 : index
    %c0_18 = arith.constant 0 : index
    %24 = vector.load %arg8[%c0_17, %c0_18] : memref<32x128xf32, #tpu.memory_space<vmem>>, vector<32x128xf32>
    tpu.vector_store %arg8[%c0_17, %c0_18], %23 {strides = array<i32>} : memref<32x128xf32, #tpu.memory_space<vmem>>, vector<32x128xf32>,
    return
  }
  func.func @transform_0(%arg0: i32) -> (i32, i32) {
    %c0_i32 = arith.constant 0 : i32
    %c0_i32_0 = arith.constant 0 : i32
    return %arg0, %c0_i32 : i32, i32
  }
  func.func @transform_1(%arg0: i32) -> (i32, i32) {
    %c0_i32 = arith.constant 0 : i32
    %c0_i32_0 = arith.constant 0 : i32
    %c0_i32_1 = arith.constant 0 : i32
    return %c0_i32, %c0_i32_0 : i32, i32
  }
  func.func @transform_2(%arg0: i32) -> (i32, i32) {
    %c0_i32 = arith.constant 0 : i32
    %c0_i32_0 = arith.constant 0 : i32
    %c0_i32_1 = arith.constant 0 : i32
    return %c0_i32, %c0_i32_0 : i32, i32
  }
  func.func @transform_3(%arg0: i32) -> (i32, i32) {
    %c0_i32 = arith.constant 0 : i32
    %c0_i32_0 = arith.constant 0 : i32
    %c0_i32_1 = arith.constant 0 : i32
    return %c0_i32, %c0_i32_0 : i32, i32
  }
  func.func @transform_4(%arg0: i32) -> (i32, i32) {
    %c0_i32 = arith.constant 0 : i32
    %c0_i32_0 = arith.constant 0 : i32
    %c0_i32_1 = arith.constant 0 : i32
    return %c0_i32, %c0_i32_0 : i32, i32
  }
  func.func @transform_5(%arg0: i32) -> (i32, i32) {
    %c0_i32 = arith.constant 0 : i32
    %c0_i32_0 = arith.constant 0 : i32
    %c0_i32_1 = arith.constant 0 : i32
    return %c0_i32, %c0_i32_0 : i32, i32
  }
  func.func @transform_6(%arg0: i32) -> (i32, i32) {
    %c0_i32 = arith.constant 0 : i32
    %c0_i32_0 = arith.constant 0 : i32
    %c0_i32_1 = arith.constant 0 : i32
    return %c0_i32, %c0_i32_0 : i32, i32
  }
  func.func @transform_7(%arg0: i32) -> (i32, i32) {
    %c0_i32 = arith.constant 0 : i32
    %c0_i32_0 = arith.constant 0 : i32
    return %arg0, %c0_i32 : i32, i32
  }
}

</mosaic_0001>

<llo_original>
// kernel: tpu_custom_call.1
$region0: #{tpu_custom_call.1}
  #allocation0 [shape = 'u32[]', space=smem, size = 0x4, offset = 0x4, fixed_abs, tag = 'smem constant byte address 0x4 - core index']
  #allocation1 [shape = 'u32[144,128]{1,0:T(1,128)}', space=vmem, size = 0x12000, scoped, tag = 'internal scratch']
  %s0 = inlined_call_operand.hbm [shape: f32[40,128], index: 0, kind: input, shape index: {}]
  %s1 = inlined_call_operand.hbm [shape: bf16[128,128], index: 1, kind: input, shape index: {}]
  %s2 = inlined_call_operand.vmem [shape: f32[1,128], index: 2, kind: input, shape index: {}]
  %s3 = inlined_call_operand.hbm [shape: bf16[128,128], index: 3, kind: input, shape index: {}]
  %s4 = inlined_call_operand.vmem [shape: f32[1,128], index: 4, kind: input, shape index: {}]
  %s5 = inlined_call_operand.hbm [shape: bf16[128,128], index: 5, kind: input, shape index: {}]
  %s6 = inlined_call_operand.vmem [shape: f32[1,128], index: 6, kind: input, shape index: {}]
  %s7 = inlined_call_operand.hbm [shape: f32[40,128], index: 7, kind: output, shape index: {}]
  %s8 = sld [smem:[#allocation0]]
  $region77: #{tpu_custom_call.1} parent=0
    _
  %s10 = ssub.s32 1, %s8
  %s11 = scalar_select 0, %s10, %s8
  $region1: #{tpu_custom_call.1} parent=0
    #allocation2 [shape = 'u8[32768]{0}', space=vmem, size = 0x8000, scoped, tag = 'input window, operand 0']
    #allocation3 [shape = 's32[2]{0}', space=sflag, size = 0x8, scoped, tag = 'scoped memory for tpu_custom_call.1']
    #allocation4 [shape = 's32[2]{0}', space=sflag, size = 0x8, scoped, tag = 'scoped memory for tpu_custom_call.1']
    #allocation5 [shape = 'u8[32768]{0}', space=vmem, size = 0x8000, scoped, tag = 'input window, operand 1, single buffered']
    #allocation6 [shape = 's32[1]{0}', space=sflag, size = 0x4, scoped, tag = 'scoped memory for tpu_custom_call.1']
    #allocation7 [shape = 'u8[32768]{0}', space=vmem, size = 0x8000, scoped, tag = 'input window, operand 3, single buffered']
    #allocation8 [shape = 'u8[32768]{0}', space=vmem, size = 0x8000, scoped, tag = 'input window, operand 5, single buffered']
    #allocation9 [shape = 's32[1]{0}', space=sflag, size = 0x4, scoped, tag = 'scoped memory for tpu_custom_call.1']
    #allocation10 [shape = 'u8[32768]{0}', space=vmem, size = 0x8000, scoped, tag = 'output window, operand 0']
    %12 = vsyncpa [#allocation3], 0
    %s13 = scalar_lea.sflag [#allocation3], 1
    %14 = vsyncpa %s13, 0
    %15 = vsyncpa [#allocation6], 0
    %16 = vsyncpa [#allocation9], 0
    %17 = vsyncpa [#allocation4], 0
    %s18 = scalar_lea.sflag [#allocation4], 1
    %19 = vsyncpa %s18, 0
    loop: start=0, step=1, limit=4
    $region2: #{tpu_custom_call.1} parent=1 // loop_pre_header
      _
    $region3: #{tpu_custom_call.1} parent=1 // loop_header
      %s21 = sphi 0, %s25
      %p22 = scmp.ge.s32.totalorder %s21, 4
      %s31 = sphi 0, %s33
      %s34 = sphi 0, %s31
      %s35 = sphi 0, %s34
      %s51 = sphi 0, %s35
      %s55 = sphi 0, %s55
      %s57 = sphi 0, %s55
      %s58 = sphi 0, %s57
      %s72 = sphi 0, %s58
      %s76 = sphi 0, %s76
      %s78 = sphi 0, %s76
      %s79 = sphi 0, %s78
      %s93 = sphi 0, %s79
      %s97 = sphi 0, %s97
      %s99 = sphi 0, %s97
      %s100 = sphi 0, %s99
      %s114 = sphi 0, %s100
      %s118 = sphi 0, %s118
      %s120 = sphi 0, %s118
      %s121 = sphi 0, %s120
      %s135 = sphi 0, %s121
      %s139 = sphi 0, %s139
      %s141 = sphi 0, %s139
      %s142 = sphi 0, %s141
      %s156 = sphi 0, %s142
      %s160 = sphi 0, %s160
      %s162 = sphi 0, %s160
      %s163 = sphi 0, %s162
      %s177 = sphi 0, %s163
      %s183 = sphi 0, %s185
      %s186 = sphi 0, %s183
      %s187 = sphi 0, %s186
      %s203 = sphi 0, %s187
    $region4: #{tpu_custom_call.1} parent=1 // loop_header_branch
      %24 = sbr.rel (%p22) target = $region8
    $region5: #{tpu_custom_call.1} parent=1 // loop_body
      %s26 = ssub.s32 %s21, 1
      %s27 = ssub.s32 %s21, 2
      %s28 = sadd.s32 %s21, 1
      %s29 = ssub.s32 %s21, %s28
      %p30 = scmp.eq.s32.totalorder %s29, 0
      %s32 = sadd.s32 %s31, 1
      %s33 = scalar_select %p30, %s31, %s32
      %p36 = pneg %p30
      %p37 = scmp.eq.s32.totalorder %s21, 1
      %p38 = por %p36, %p37
      %p39 = scmp.ne.s32.totalorder %s31, %s34
      %p40 = scmp.eq.s32.totalorder %s21, 0
      %p41 = por %p39, %p40
      %p42 = scmp.ne.s32.totalorder %s31, %s34
      %p43 = scmp.eq.s32.totalorder %s26, 1
      %p44 = por %p42, %p43
      %p45 = scmp.ne.s32.totalorder %s34, %s35
      %p46 = scmp.eq.s32.totalorder %s26, 0
      %p47 = por %p45, %p46
      %p48 = scmp.ne.s32.totalorder %s34, %s35
      %p49 = scmp.eq.s32.totalorder %s27, 1
      %p50 = por %p48, %p49
      %p52 = scmp.ne.s32.totalorder %s35, %s51
      %p53 = scmp.eq.s32.totalorder %s27, 0
      %p54 = por %p52, %p53
      %s56 = sadd.s32 %s55, 1
      %p59 = scmp.eq.s32.totalorder %s21, 1
      %p60 = scmp.ne.s32.totalorder %s55, %s57
      %p61 = scmp.eq.s32.totalorder %s21, 0
      %p62 = por %p60, %p61
      %p63 = scmp.ne.s32.totalorder %s55, %s57
      %p64 = scmp.eq.s32.totalorder %s26, 1
      %p65 = por %p63, %p64
      %p66 = scmp.ne.s32.totalorder %s57, %s58
      %p67 = scmp.eq.s32.totalorder %s26, 0
      %p68 = por %p66, %p67
      %p69 = scmp.ne.s32.totalorder %s57, %s58
      %p70 = scmp.eq.s32.totalorder %s27, 1
      %p71 = por %p69, %p70
      %p73 = scmp.ne.s32.totalorder %s58, %s72
      %p74 = scmp.eq.s32.totalorder %s27, 0
      %p75 = por %p73, %p74
      %s77 = sadd.s32 %s76, 1
      %p80 = scmp.eq.s32.totalorder %s21, 1
      %p81 = scmp.ne.s32.totalorder %s76, %s78
      %p82 = scmp.eq.s32.totalorder %s21, 0
      %p83 = por %p81, %p82
      %p84 = scmp.ne.s32.totalorder %s76, %s78
      %p85 = scmp.eq.s32.totalorder %s26, 1
      %p86 = por %p84, %p85
      %p87 = scmp.ne.s32.totalorder %s78, %s79
      %p88 = scmp.eq.s32.totalorder %s26, 0
      %p89 = por %p87, %p88
      %p90 = scmp.ne.s32.totalorder %s78, %s79
      %p91 = scmp.eq.s32.totalorder %s27, 1
      %p92 = por %p90, %p91
      %p94 = scmp.ne.s32.totalorder %s79, %s93
      %p95 = scmp.eq.s32.totalorder %s27, 0
      %p96 = por %p94, %p95
      %s98 = sadd.s32 %s97, 1
      %p101 = scmp.eq.s32.totalorder %s21, 1
      %p102 = scmp.ne.s32.totalorder %s97, %s99
      %p103 = scmp.eq.s32.totalorder %s21, 0
      %p104 = por %p102, %p103
      %p105 = scmp.ne.s32.totalorder %s97, %s99
      %p106 = scmp.eq.s32.totalorder %s26, 1
      %p107 = por %p105, %p106
      %p108 = scmp.ne.s32.totalorder %s99, %s100
      %p109 = scmp.eq.s32.totalorder %s26, 0
      %p110 = por %p108, %p109
      %p111 = scmp.ne.s32.totalorder %s99, %s100
      %p112 = scmp.eq.s32.totalorder %s27, 1
      %p113 = por %p111, %p112
      %p115 = scmp.ne.s32.totalorder %s100, %s114
      %p116 = scmp.eq.s32.totalorder %s27, 0
      %p117 = por %p115, %p116
      %s119 = sadd.s32 %s118, 1
      %p122 = scmp.eq.s32.totalorder %s21, 1
      %p123 = scmp.ne.s32.totalorder %s118, %s120
      %p124 = scmp.eq.s32.totalorder %s21, 0
      %p125 = por %p123, %p124
      %p126 = scmp.ne.s32.totalorder %s118, %s120
      %p127 = scmp.eq.s32.totalorder %s26, 1
      %p128 = por %p126, %p127
      %p129 = scmp.ne.s32.totalorder %s120, %s121
      %p130 = scmp.eq.s32.totalorder %s26, 0
      %p131 = por %p129, %p130
      %p132 = scmp.ne.s32.totalorder %s120, %s121
      %p133 = scmp.eq.s32.totalorder %s27, 1
      %p134 = por %p132, %p133
      %p136 = scmp.ne.s32.totalorder %s121, %s135
      %p137 = scmp.eq.s32.totalorder %s27, 0
      %p138 = por %p136, %p137
      %s140 = sadd.s32 %s139, 1
      %p143 = scmp.eq.s32.totalorder %s21, 1
      %p144 = scmp.ne.s32.totalorder %s139, %s141
      %p145 = scmp.eq.s32.totalorder %s21, 0
      %p146 = por %p144, %p145
      %p147 = scmp.ne.s32.totalorder %s139, %s141
      %p148 = scmp.eq.s32.totalorder %s26, 1
      %p149 = por %p147, %p148
      %p150 = scmp.ne.s32.totalorder %s141, %s142
      %p151 = scmp.eq.s32.totalorder %s26, 0
      %p152 = por %p150, %p151
      %p153 = scmp.ne.s32.totalorder %s141, %s142
      %p154 = scmp.eq.s32.totalorder %s27, 1
      %p155 = por %p153, %p154
      %p157 = scmp.ne.s32.totalorder %s142, %s156
      %p158 = scmp.eq.s32.totalorder %s27, 0
      %p159 = por %p157, %p158
      %s161 = sadd.s32 %s160, 1
      %p164 = scmp.eq.s32.totalorder %s21, 1
      %p165 = scmp.ne.s32.totalorder %s160, %s162
      %p166 = scmp.eq.s32.totalorder %s21, 0
      %p167 = por %p165, %p166
      %p168 = scmp.ne.s32.totalorder %s160, %s162
      %p169 = scmp.eq.s32.totalorder %s26, 1
      %p170 = por %p168, %p169
      %p171 = scmp.ne.s32.totalorder %s162, %s163
      %p172 = scmp.eq.s32.totalorder %s26, 0
      %p173 = por %p171, %p172
      %p174 = scmp.ne.s32.totalorder %s162, %s163
      %p175 = scmp.eq.s32.totalorder %s27, 1
      %p176 = por %p174, %p175
      %p178 = scmp.ne.s32.totalorder %s163, %s177
      %p179 = scmp.eq.s32.totalorder %s27, 0
      %p180 = por %p178, %p179
      %s181 = ssub.s32 %s21, %s28
      %p182 = scmp.eq.s32.totalorder %s181, 0
      %s184 = sadd.s32 %s183, 1
      %s185 = scalar_select %p182, %s183, %s184
      %p188 = pneg %p182
      %p189 = scmp.eq.s32.totalorder %s21, 1
      %p190 = por %p188, %p189
      %p191 = scmp.ne.s32.totalorder %s183, %s186
      %p192 = scmp.eq.s32.totalorder %s21, 0
      %p193 = por %p191, %p192
      %p194 = scmp.ne.s32.totalorder %s183, %s186
      %p195 = scmp.eq.s32.totalorder %s26, 1
      %p196 = por %p194, %p195
      %p197 = scmp.ne.s32.totalorder %s186, %s187
      %p198 = scmp.eq.s32.totalorder %s26, 0
      %p199 = por %p197, %p198
      %p200 = scmp.ne.s32.totalorder %s186, %s187
      %p201 = scmp.eq.s32.totalorder %s27, 1
      %p202 = por %p200, %p201
      %p204 = scmp.ne.s32.totalorder %s187, %s203
      %p205 = scmp.eq.s32.totalorder %s27, 0
      %p206 = por %p204, %p205
      %p207 = scmp.le.s32.totalorder 1, %s21
      %p208 = scmp.lt.s32.totalorder %s21, 3
      %p209 = pnand %p207, %p208
      %p210 = pneg %p209
      // Predicated region
      $region9: #{tpu_custom_call.1} parent=5 // pred_check
        _
      $region10: #{tpu_custom_call.1} parent=5 // pred_check_branch
        %212 = sbr.rel (%p209) target = $region12
      $region11: #{tpu_custom_call.1} parent=5 // pred_region
        %s213 = ssub.s32 %s21, 1
        // Predicated region
        $region13: #{tpu_custom_call.1} parent=11 // pred_check
          %p214 = pneg %p68
        $region14: #{tpu_custom_call.1} parent=11 // pred_check_branch
          %216 = sbr.rel (%p214) target = $region16
        $region15: #{tpu_custom_call.1} parent=11 // pred_region
          %s218 = ssub.s32 1024, 1024
          %219 = vsyncadd [#allocation6], %s218
          %s220 = sshll.u32 [#allocation5], 4
          %s221 = int_to_ptr.vmem [resolvable:$true] %s220
          %226 = dma.hbm_to_vmem [thread:$0]  %s1, 1024, %s221, [#allocation6], 64, 64, 4
        $region16: #{tpu_custom_call.1} parent=11 // pred_fallthru
          _
        // Predicated region
        $region17: #{tpu_custom_call.1} parent=11 // pred_check
          %p227 = pneg %p89
        $region18: #{tpu_custom_call.1} parent=11 // pred_check_branch
          %229 = sbr.rel (%p227) target = $region20
        $region19: #{tpu_custom_call.1} parent=11 // pred_region
          _
        $region20: #{tpu_custom_call.1} parent=11 // pred_fallthru
          _
        // Predicated region
        $region21: #{tpu_custom_call.1} parent=11 // pred_check
          %p230 = pneg %p110
        $region22: #{tpu_custom_call.1} parent=11 // pred_check_branch
          %232 = sbr.rel (%p230) target = $region24
        $region23: #{tpu_custom_call.1} parent=11 // pred_region
          %s234 = ssub.s32 1024, 1024
          %235 = vsyncadd [#allocation6], %s234
          %s236 = sshll.u32 [#allocation7], 4
          %s237 = int_to_ptr.vmem [resolvable:$true] %s236
          %242 = dma.hbm_to_vmem [thread:$0]  %s3, 1024, %s237, [#allocation6], 64, 64, 4
        $region24: #{tpu_custom_call.1} parent=11 // pred_fallthru
          _
        // Predicated region
        $region25: #{tpu_custom_call.1} parent=11 // pred_check
          %p243 = pneg %p131
        $region26: #{tpu_custom_call.1} parent=11 // pred_check_branch
          %245 = sbr.rel (%p243) target = $region28
        $region27: #{tpu_custom_call.1} parent=11 // pred_region
          _
        $region28: #{tpu_custom_call.1} parent=11 // pred_fallthru
          _
        // Predicated region
        $region29: #{tpu_custom_call.1} parent=11 // pred_check
          %p246 = pneg %p152
        $region30: #{tpu_custom_call.1} parent=11 // pred_check_branch
          %248 = sbr.rel (%p246) target = $region32
        $region31: #{tpu_custom_call.1} parent=11 // pred_region
          %s250 = ssub.s32 1024, 1024
          %251 = vsyncadd [#allocation9], %s250
          %s252 = sshll.u32 [#allocation8], 4
          %s253 = int_to_ptr.vmem [resolvable:$true] %s252
          %258 = dma.hbm_to_vmem [thread:$0]  %s5, 1024, %s253, [#allocation9], 64, 64, 4
        $region32: #{tpu_custom_call.1} parent=11 // pred_fallthru
          _
        // Predicated region
        $region33: #{tpu_custom_call.1} parent=11 // pred_check
          %p259 = pneg %p173
        $region34: #{tpu_custom_call.1} parent=11 // pred_check_branch
          %261 = sbr.rel (%p259) target = $region36
        $region35: #{tpu_custom_call.1} parent=11 // pred_region
          _
        $region36: #{tpu_custom_call.1} parent=11 // pred_fallthru
          _
      $region12: #{tpu_custom_call.1} parent=5 // pred_fallthru
        _
      %p262 = scmp.lt.s32.totalorder %s21, 2
      // Predicated region
      $region37: #{tpu_custom_call.1} parent=5 // pred_check
        %p263 = pneg %p262
      $region38: #{tpu_custom_call.1} parent=5 // pred_check_branch
        %265 = sbr.rel (%p263) target = $region40
      $region39: #{tpu_custom_call.1} parent=5 // pred_region
        // Predicated region
        $region41: #{tpu_custom_call.1} parent=39 // pred_check
          %p266 = pneg %p41
        $region42: #{tpu_custom_call.1} parent=39 // pred_check_branch
          %268 = sbr.rel (%p266) target = $region44
        $region43: #{tpu_custom_call.1} parent=39 // pred_region
          %s269 = sand.u32 %s31, 1
          %s270 = scalar_lea.sflag [#allocation3], %s269
          %s271 = sand.u32 %s31, 1
          %s272 = smul.addr %s271, 32
          %s273 = scalar_lea.vmem [#allocation2], %s272
          %s274 = smul.u32 4, %s21
          %s275 = ssub.s32 5, %s274
          %p276 = scmp.lt.s32.totalorder %s275, 4
          %s277 = scalar_select %p276, %s275, 4
          %s278 = smul.u32 128, %s277
          %s280 = ssub.s32 512, %s278
          %281 = vsyncadd %s270, %s280
          %p282 = scmp.ne.s32.totalorder 0, %s278
          %s283 = smul.addr %s274, 128
          %s284 = scalar_lea.hbm %s0, %s283
          %s285 = smul.u32 8, %s277
          %s286 = sshll.u32 %s273, 4
          %s287 = int_to_ptr.vmem [resolvable:$true] %s286
          %s288 = sshll.u32 %s285, 4
          %292 = dma.hbm_to_vmem [thread:$0]  (%p282), %s284, %s288, %s287, %s270, 128, 128, 8
        $region44: #{tpu_custom_call.1} parent=39 // pred_fallthru
          _
      $region40: #{tpu_custom_call.1} parent=5 // pred_fallthru
        _
      %p293 = scmp.le.s32.totalorder 1, %s21
      %p294 = scmp.lt.s32.totalorder %s21, 3
      %p295 = pnand %p293, %p294
      %p296 = pneg %p295
      // Predicated region
      $region45: #{tpu_custom_call.1} parent=5 // pred_check
        _
      $region46: #{tpu_custom_call.1} parent=5 // pred_check_branch
        %298 = sbr.rel (%p295) target = $region48
      $region47: #{tpu_custom_call.1} parent=5 // pred_region
        %s299 = ssub.s32 %s21, 1
        %s300 = sand.u32 %s34, 1
        %s301 = scalar_lea.sflag [#allocation3], %s300
        %s302 = sand.u32 %s34, 1
        %s303 = smul.addr %s302, 32
        %s304 = scalar_lea.vmem [#allocation2], %s303
        // Predicated region
        $region49: #{tpu_custom_call.1} parent=47 // pred_check
          %p305 = pneg %p47
        $region50: #{tpu_custom_call.1} parent=47 // pred_check_branch
          %307 = sbr.rel (%p305) target = $region52
        $region51: #{tpu_custom_call.1} parent=47 // pred_region
          %308 = dma.done %s301, 512
        $region52: #{tpu_custom_call.1} parent=47 // pred_fallthru
          _
        // Predicated region
        $region53: #{tpu_custom_call.1} parent=47 // pred_check
          %p309 = pneg %p68
        $region54: #{tpu_custom_call.1} parent=47 // pred_check_branch
          %311 = sbr.rel (%p309) target = $region56
        $region55: #{tpu_custom_call.1} parent=47 // pred_region
          %312 = dma.done [#allocation6], 1024
        $region56: #{tpu_custom_call.1} parent=47 // pred_fallthru
          _
        // Predicated region
        $region57: #{tpu_custom_call.1} parent=47 // pred_check
          %p313 = pneg %p110
        $region58: #{tpu_custom_call.1} parent=47 // pred_check_branch
          %315 = sbr.rel (%p313) target = $region60
        $region59: #{tpu_custom_call.1} parent=47 // pred_region
          %316 = dma.done [#allocation6], 1024
        $region60: #{tpu_custom_call.1} parent=47 // pred_fallthru
          _
        // Predicated region
        $region61: #{tpu_custom_call.1} parent=47 // pred_check
          %p317 = pneg %p152
        $region62: #{tpu_custom_call.1} parent=47 // pred_check_branch
          %319 = sbr.rel (%p317) target = $region64
        $region63: #{tpu_custom_call.1} parent=47 // pred_region
          %320 = dma.done [#allocation9], 1024
        $region64: #{tpu_custom_call.1} parent=47 // pred_fallthru
          _
        %s321 = sand.u32 %s34, 1
        %s322 = scalar_lea.sflag [#allocation3], %s321
        %s323 = sand.u32 %s34, 1
        %s324 = smul.addr %s323, 32
        %s325 = scalar_lea.vmem [#allocation2], %s324
        %p326 = pneg %p47
        %p327 = pneg %p44
        %p328 = pneg %p68
        %p329 = pneg %p65
        %p330 = pneg %p89
        %p331 = pneg %p86
        %p332 = pneg %p110
        %p333 = pneg %p107
        %p334 = pneg %p131
        %p335 = pneg %p128
        %p336 = pneg %p152
        %p337 = pneg %p149
        %p338 = pneg %p173
        %p339 = pneg %p170
        %p340 = pneg %p199
        %p341 = pneg %p196
        %s342 = sand.u32 %s186, 1
        %s343 = scalar_lea.sflag [#allocation4], %s342
        %s344 = sand.u32 %s186, 1
        %s345 = smul.addr %s344, 32
        %s346 = scalar_lea.vmem [#allocation10], %s345
        %s347 = smul.u32 4, %s26
        %s348 = ssub.s32 5, %s347
        %p349 = scmp.lt.s32.totalorder %s348, 4
        %s350 = scalar_select %p349, %s348, 4
        %s351 = smul.u32 128, %s350
        %s352 = smul.u32 4, %s26
        %s353 = ssub.s32 5, %s352
        %p354 = scmp.lt.s32.totalorder %s353, 4
        %s355 = scalar_select %p354, %s353, 4
        %s356 = smul.u32 128, %s355
        %v358 = vld [vmem:[%s304] sm:$0xff]
        %v359 = vld [vmem:[%s304 + $0x8] sm:$0xff]
        %v360 = vld [vmem:[%s304 + $0x10] sm:$0xff]
        %v361 = vld [vmem:[%s304 + $0x18] sm:$0xff]
        %v362 = vpack.c.bf16 %v359, %v358
        %v363 = vpack.c.bf16 %v361, %v360
        %v364 = vld [vmem:[#allocation5] sm:$0xf]
        %v365 = vld [vmem:[#allocation5 + $0x4] sm:$0xf]
        %v366 = vld [vmem:[#allocation5 + $0x8] sm:$0xf]
        %v367 = vld [vmem:[#allocation5 + $0xc] sm:$0xf]
        %v368 = vld [vmem:[#allocation5 + $0x10] sm:$0xf]
        %v369 = vld [vmem:[#allocation5 + $0x14] sm:$0xf]
        %v370 = vld [vmem:[#allocation5 + $0x18] sm:$0xf]
        %v371 = vld [vmem:[#allocation5 + $0x1c] sm:$0xf]
        %v372 = vld [vmem:[#allocation5 + $0x20] sm:$0xf]
        %v373 = vld [vmem:[#allocation5 + $0x24] sm:$0xf]
        %v374 = vld [vmem:[#allocation5 + $0x28] sm:$0xf]
        %v375 = vld [vmem:[#allocation5 + $0x2c] sm:$0xf]
        %v376 = vld [vmem:[#allocation5 + $0x30] sm:$0xf]
        %v377 = vld [vmem:[#allocation5 + $0x34] sm:$0xf]
        %v378 = vld [vmem:[#allocation5 + $0x38] sm:$0xf]
        %v379 = vld [vmem:[#allocation5 + $0x3c] sm:$0xf]
        %v380 = vld [vmem:[%s2] sm:$0x1]
        %v382 = vlaneseq
        %v383 = vshrl.u32 %v382, 7
        %v384 = vsub.s32 0, %v383
        %v385 = vrot.slane %v380, %v384
        %v403 = vunpack.c.l.b16 %v364
        %v404 = vunpack.c.l.b16 %v365
        %v405 = vunpack.c.l.b16 %v366
        %v406 = vunpack.c.l.b16 %v367
        %v407 = vunpack.c.l.b16 %v368
        %v408 = vunpack.c.l.b16 %v369
        %v409 = vunpack.c.l.b16 %v370
        %v410 = vunpack.c.l.b16 %v371
        %v411 = vunpack.c.l.b16 %v372
        %v412 = vunpack.c.l.b16 %v373
        %v413 = vunpack.c.l.b16 %v374
        %v414 = vunpack.c.l.b16 %v375
        %v415 = vunpack.c.l.b16 %v376
        %v416 = vunpack.c.l.b16 %v377
        %v417 = vunpack.c.l.b16 %v378
        %v418 = vunpack.c.l.b16 %v379
        %v419 = vpack.c.b16 %v404, %v403
        %v420 = vpack.c.b16 %v406, %v405
        %v421 = vpack.c.b16 %v408, %v407
        %v422 = vpack.c.b16 %v410, %v409
        %v423 = vpack.c.b16 %v412, %v411
        %v424 = vpack.c.b16 %v414, %v413
        %v425 = vpack.c.b16 %v416, %v415
        %v426 = vpack.c.b16 %v418, %v417
        %435 = vmatprep.subr.bf16.mxu0 0
        %436 = vmatpush1.bf16.msra.mxu0 %v426
        %437 = vmatprep.subr.bf16.mxu0 0
        %438 = vmatpush1.bf16.msra.mxu0 %v425
        %439 = vmatprep.subr.bf16.mxu0 0
        %440 = vmatpush1.bf16.msra.mxu0 %v424
        %441 = vmatprep.subr.bf16.mxu0 0
        %442 = vmatpush1.bf16.msra.mxu0 %v423
        %443 = vmatprep.subr.bf16.mxu0 0
        %444 = vmatpush1.bf16.msra.mxu0 %v422
        %445 = vmatprep.subr.bf16.mxu0 0
        %446 = vmatpush1.bf16.msra.mxu0 %v421
        %447 = vmatprep.subr.bf16.mxu0 0
        %448 = vmatpush1.bf16.msra.mxu0 %v420
        %449 = vmatprep.subr.bf16.mxu0 0
        %450 = vmatpush1.bf16.msra.mxu0 %v419
        %451 = vmatprep.subr.bf16.mxu0 0
        %452 = vmatpush2.bf16.msra.mxu0 0
        %453 = vmatprep.subr.bf16.mxu0 0
        %454 = vmatpush2.bf16.msra.mxu0 0
        %455 = vmatprep.subr.bf16.mxu0 0
        %456 = vmatpush2.bf16.msra.mxu0 0
        %457 = vmatprep.subr.bf16.mxu0 0
        %458 = vmatpush2.bf16.msra.mxu0 0
        %459 = vmatprep.subr.bf16.mxu0 0
        %460 = vmatpush2.bf16.msra.mxu0 0
        %461 = vmatprep.subr.bf16.mxu0 0
        %462 = vmatpush2.bf16.msra.mxu0 0
        %463 = vmatprep.subr.bf16.mxu0 0
        %464 = vmatpush2.bf16.msra.mxu0 0
        %465 = vmatprep.subr.bf16.mxu0 0
        %466 = vmatpush2.bf16.msra.mxu0 0
        %467 = vmatprep.mubr.bf16.mxu0 0
        %468 = vmatmul.mubr.bf16.gmra.mxu0 %v362
        %v469 = vpop.f32.mrf.mxu0
        %v470 = vadd.f32 %v385, %v469
        %v471 = vpop.f32.mrf.mxu0
        %v472 = vpop.f32.mrf.mxu0
        %v473 = vadd.f32 %v385, %v472
        %v474 = vpop.f32.mrf.mxu0
        %475 = vmatprep.mubr.bf16.mxu0 0
        %476 = vmatmul.mubr.bf16.gmra.mxu0 %v363
        %v477 = vpop.f32.mrf.mxu0
        %v478 = vadd.f32 %v385, %v477
        %v479 = vpop.f32.mrf.mxu0
        %v480 = vpop.f32.mrf.mxu0
        %v481 = vadd.f32 %v385, %v480
        %v482 = vpop.f32.mrf.mxu0
        %483 = vdwg.mxu0
        %v484 = vmax.f32 %v470, 0.0
        %v485 = vmax.f32 %v473, 0.0
        %v486 = vmax.f32 %v478, 0.0
        %v487 = vmax.f32 %v481, 0.0
        %v488 = vpack.c.bf16 %v485, %v484
        %v489 = vpack.c.bf16 %v487, %v486
        %v490 = vld [vmem:[#allocation7] sm:$0xf]
        %v491 = vld [vmem:[#allocation7 + $0x4] sm:$0xf]
        %v492 = vld [vmem:[#allocation7 + $0x8] sm:$0xf]
        %v493 = vld [vmem:[#allocation7 + $0xc] sm:$0xf]
        %v494 = vld [vmem:[#allocation7 + $0x10] sm:$0xf]
        %v495 = vld [vmem:[#allocation7 + $0x14] sm:$0xf]
        %v496 = vld [vmem:[#allocation7 + $0x18] sm:$0xf]
        %v497 = vld [vmem:[#allocation7 + $0x1c] sm:$0xf]
        %v498 = vld [vmem:[#allocation7 + $0x20] sm:$0xf]
        %v499 = vld [vmem:[#allocation7 + $0x24] sm:$0xf]
        %v500 = vld [vmem:[#allocation7 + $0x28] sm:$0xf]
        %v501 = vld [vmem:[#allocation7 + $0x2c] sm:$0xf]
        %v502 = vld [vmem:[#allocation7 + $0x30] sm:$0xf]
        %v503 = vld [vmem:[#allocation7 + $0x34] sm:$0xf]
        %v504 = vld [vmem:[#allocation7 + $0x38] sm:$0xf]
        %v505 = vld [vmem:[#allocation7 + $0x3c] sm:$0xf]
        %v506 = vld [vmem:[%s4] sm:$0x1]
        %v508 = vlaneseq
        %v509 = vshrl.u32 %v508, 7
        %v510 = vsub.s32 0, %v509
        %v511 = vrot.slane %v506, %v510
        %v529 = vunpack.c.l.b16 %v490
        %v530 = vunpack.c.l.b16 %v491
        %v531 = vunpack.c.l.b16 %v492
        %v532 = vunpack.c.l.b16 %v493
        %v533 = vunpack.c.l.b16 %v494
        %v534 = vunpack.c.l.b16 %v495
        %v535 = vunpack.c.l.b16 %v496
        %v536 = vunpack.c.l.b16 %v497
        %v537 = vunpack.c.l.b16 %v498
        %v538 = vunpack.c.l.b16 %v499
        %v539 = vunpack.c.l.b16 %v500
        %v540 = vunpack.c.l.b16 %v501
        %v541 = vunpack.c.l.b16 %v502
        %v542 = vunpack.c.l.b16 %v503
        %v543 = vunpack.c.l.b16 %v504
        %v544 = vunpack.c.l.b16 %v505
        %v545 = vpack.c.b16 %v530, %v529
        %v546 = vpack.c.b16 %v532, %v531
        %v547 = vpack.c.b16 %v534, %v533
        %v548 = vpack.c.b16 %v536, %v535
        %v549 = vpack.c.b16 %v538, %v537
        %v550 = vpack.c.b16 %v540, %v539
        %v551 = vpack.c.b16 %v542, %v541
        %v552 = vpack.c.b16 %v544, %v543
        %561 = vmatprep.subr.bf16.mxu0 0
        %562 = vmatpush1.bf16.msra.mxu0 %v552
        %563 = vmatprep.subr.bf16.mxu0 0
        %564 = vmatpush1.bf16.msra.mxu0 %v551
        %565 = vmatprep.subr.bf16.mxu0 0
        %566 = vmatpush1.bf16.msra.mxu0 %v550
        %567 = vmatprep.subr.bf16.mxu0 0
        %568 = vmatpush1.bf16.msra.mxu0 %v549
        %569 = vmatprep.subr.bf16.mxu0 0
        %570 = vmatpush1.bf16.msra.mxu0 %v548
        %571 = vmatprep.subr.bf16.mxu0 0
        %572 = vmatpush1.bf16.msra.mxu0 %v547
        %573 = vmatprep.subr.bf16.mxu0 0
        %574 = vmatpush1.bf16.msra.mxu0 %v546
        %575 = vmatprep.subr.bf16.mxu0 0
        %576 = vmatpush1.bf16.msra.mxu0 %v545
        %577 = vmatprep.subr.bf16.mxu0 0
        %578 = vmatpush2.bf16.msra.mxu0 0
        %579 = vmatprep.subr.bf16.mxu0 0
        %580 = vmatpush2.bf16.msra.mxu0 0
        %581 = vmatprep.subr.bf16.mxu0 0
        %582 = vmatpush2.bf16.msra.mxu0 0
        %583 = vmatprep.subr.bf16.mxu0 0
        %584 = vmatpush2.bf16.msra.mxu0 0
        %585 = vmatprep.subr.bf16.mxu0 0
        %586 = vmatpush2.bf16.msra.mxu0 0
        %587 = vmatprep.subr.bf16.mxu0 0
        %588 = vmatpush2.bf16.msra.mxu0 0
        %589 = vmatprep.subr.bf16.mxu0 0
        %590 = vmatpush2.bf16.msra.mxu0 0
        %591 = vmatprep.subr.bf16.mxu0 0
        %592 = vmatpush2.bf16.msra.mxu0 0
        %593 = vmatprep.mubr.bf16.mxu0 0
        %594 = vmatmul.mubr.bf16.gmra.mxu0 %v488
        %v595 = vpop.f32.mrf.mxu0
        %v596 = vadd.f32 %v511, %v595
        %v597 = vpop.f32.mrf.mxu0
        %v598 = vpop.f32.mrf.mxu0
        %v599 = vadd.f32 %v511, %v598
        %v600 = vpop.f32.mrf.mxu0
        %601 = vmatprep.mubr.bf16.mxu0 0
        %602 = vmatmul.mubr.bf16.gmra.mxu0 %v489
        %v603 = vpop.f32.mrf.mxu0
        %v604 = vadd.f32 %v511, %v603
        %v605 = vpop.f32.mrf.mxu0
        %v606 = vpop.f32.mrf.mxu0
        %v607 = vadd.f32 %v511, %v606
        %v608 = vpop.f32.mrf.mxu0
        %609 = vdwg.mxu0
        %v610 = vmax.f32 %v596, 0.0
        %v611 = vmax.f32 %v599, 0.0
        %v612 = vmax.f32 %v604, 0.0
        %v613 = vmax.f32 %v607, 0.0
        %v614 = vpack.c.bf16 %v611, %v610
        %v615 = vpack.c.bf16 %v613, %v612
        %v616 = vld [vmem:[#allocation8] sm:$0xf]
        %v617 = vld [vmem:[#allocation8 + $0x4] sm:$0xf]
        %v618 = vld [vmem:[#allocation8 + $0x8] sm:$0xf]
        %v619 = vld [vmem:[#allocation8 + $0xc] sm:$0xf]
        %v620 = vld [vmem:[#allocation8 + $0x10] sm:$0xf]
        %v621 = vld [vmem:[#allocation8 + $0x14] sm:$0xf]
        %v622 = vld [vmem:[#allocation8 + $0x18] sm:$0xf]
        %v623 = vld [vmem:[#allocation8 + $0x1c] sm:$0xf]
        %v624 = vld [vmem:[#allocation8 + $0x20] sm:$0xf]
        %v625 = vld [vmem:[#allocation8 + $0x24] sm:$0xf]
        %v626 = vld [vmem:[#allocation8 + $0x28] sm:$0xf]
        %v627 = vld [vmem:[#allocation8 + $0x2c] sm:$0xf]
        %v628 = vld [vmem:[#allocation8 + $0x30] sm:$0xf]
        %v629 = vld [vmem:[#allocation8 + $0x34] sm:$0xf]
        %v630 = vld [vmem:[#allocation8 + $0x38] sm:$0xf]
        %v631 = vld [vmem:[#allocation8 + $0x3c] sm:$0xf]
        %v632 = vld [vmem:[%s6] sm:$0x1]
        %v634 = vlaneseq
        %v635 = vshrl.u32 %v634, 7
        %v636 = vsub.s32 0, %v635
        %v637 = vrot.slane %v632, %v636
        %v655 = vunpack.c.l.b16 %v616
        %v656 = vunpack.c.l.b16 %v617
        %v657 = vunpack.c.l.b16 %v618
        %v658 = vunpack.c.l.b16 %v619
        %v659 = vunpack.c.l.b16 %v620
        %v660 = vunpack.c.l.b16 %v621
        %v661 = vunpack.c.l.b16 %v622
        %v662 = vunpack.c.l.b16 %v623
        %v663 = vunpack.c.l.b16 %v624
        %v664 = vunpack.c.l.b16 %v625
        %v665 = vunpack.c.l.b16 %v626
        %v666 = vunpack.c.l.b16 %v627
        %v667 = vunpack.c.l.b16 %v628
        %v668 = vunpack.c.l.b16 %v629
        %v669 = vunpack.c.l.b16 %v630
        %v670 = vunpack.c.l.b16 %v631
        %v671 = vpack.c.b16 %v656, %v655
        %v672 = vpack.c.b16 %v658, %v657
        %v673 = vpack.c.b16 %v660, %v659
        %v674 = vpack.c.b16 %v662, %v661
        %v675 = vpack.c.b16 %v664, %v663
        %v676 = vpack.c.b16 %v666, %v665
        %v677 = vpack.c.b16 %v668, %v667
        %v678 = vpack.c.b16 %v670, %v669
        %687 = vmatprep.subr.bf16.mxu0 0
        %688 = vmatpush1.bf16.msra.mxu0 %v678
        %689 = vmatprep.subr.bf16.mxu0 0
        %690 = vmatpush1.bf16.msra.mxu0 %v677
        %691 = vmatprep.subr.bf16.mxu0 0
        %692 = vmatpush1.bf16.msra.mxu0 %v676
        %693 = vmatprep.subr.bf16.mxu0 0
        %694 = vmatpush1.bf16.msra.mxu0 %v675
        %695 = vmatprep.subr.bf16.mxu0 0
        %696 = vmatpush1.bf16.msra.mxu0 %v674
        %697 = vmatprep.subr.bf16.mxu0 0
        %698 = vmatpush1.bf16.msra.mxu0 %v673
        %699 = vmatprep.subr.bf16.mxu0 0
        %700 = vmatpush1.bf16.msra.mxu0 %v672
        %701 = vmatprep.subr.bf16.mxu0 0
        %702 = vmatpush1.bf16.msra.mxu0 %v671
        %703 = vmatprep.subr.bf16.mxu0 0
        %704 = vmatpush2.bf16.msra.mxu0 0
        %705 = vmatprep.subr.bf16.mxu0 0
        %706 = vmatpush2.bf16.msra.mxu0 0
        %707 = vmatprep.subr.bf16.mxu0 0
        %708 = vmatpush2.bf16.msra.mxu0 0
        %709 = vmatprep.subr.bf16.mxu0 0
        %710 = vmatpush2.bf16.msra.mxu0 0
        %711 = vmatprep.subr.bf16.mxu0 0
        %712 = vmatpush2.bf16.msra.mxu0 0
        %713 = vmatprep.subr.bf16.mxu0 0
        %714 = vmatpush2.bf16.msra.mxu0 0
        %715 = vmatprep.subr.bf16.mxu0 0
        %716 = vmatpush2.bf16.msra.mxu0 0
        %717 = vmatprep.subr.bf16.mxu0 0
        %718 = vmatpush2.bf16.msra.mxu0 0
        %719 = vmatprep.mubr.bf16.mxu0 0
        %720 = vmatmul.mubr.bf16.gmra.mxu0 %v614
        %v721 = vpop.f32.mrf.mxu0
        %v722 = vadd.f32 %v637, %v721
        %v723 = vpop.f32.mrf.mxu0
        %v724 = vpop.f32.mrf.mxu0
        %v725 = vadd.f32 %v637, %v724
        %v726 = vpop.f32.mrf.mxu0
        %727 = vmatprep.mubr.bf16.mxu0 0
        %728 = vmatmul.mubr.bf16.gmra.mxu0 %v615
        %v729 = vpop.f32.mrf.mxu0
        %v730 = vadd.f32 %v637, %v729
        %v731 = vpop.f32.mrf.mxu0
        %v732 = vpop.f32.mrf.mxu0
        %v733 = vadd.f32 %v637, %v732
        %v734 = vpop.f32.mrf.mxu0
        %735 = vdwg.mxu0
        %v736 = vadd.f32 %v722, %v358
        %v737 = vadd.f32 %v725, %v359
        %v738 = vadd.f32 %v730, %v360
        %v739 = vadd.f32 %v733, %v361
        %740 = vst [vmem:[%s346] sm:$0xff] %v736
        %741 = vst [vmem:[%s346 + $0x8] sm:$0xff] %v737
        %742 = vst [vmem:[%s346 + $0x10] sm:$0xff] %v738
        %743 = vst [vmem:[%s346 + $0x18] sm:$0xff] %v739
        %s744 = sand.u32 %s186, 1
        %s745 = scalar_lea.sflag [#allocation4], %s744
        %s746 = sand.u32 %s186, 1
        %s747 = smul.addr %s746, 32
        %s748 = scalar_lea.vmem [#allocation10], %s747
        // Predicated region
        $region65: #{tpu_custom_call.1} parent=47 // pred_check
          %p749 = pneg %p196
        $region66: #{tpu_custom_call.1} parent=47 // pred_check_branch
          %751 = sbr.rel (%p749) target = $region68
        $region67: #{tpu_custom_call.1} parent=47 // pred_region
          %s752 = smul.u32 4, %s26
          %s753 = ssub.s32 5, %s752
          %p754 = scmp.lt.s32.totalorder %s753, 4
          %s755 = scalar_select %p754, %s753, 4
          %s756 = smul.u32 128, %s755
          %s758 = ssub.s32 512, %s756
          %759 = vsyncadd %s745, %s758
          %p760 = scmp.ne.s32.totalorder 0, %s756
          %s761 = smul.addr %s752, 128
          %s762 = scalar_lea.hbm %s7, %s761
          %s763 = smul.u32 8, %s755
          %s764 = sshll.u32 %s748, 4
          %s765 = int_to_ptr.vmem [resolvable:$true] %s764
          %s766 = sshll.u32 %s763, 4
          %770 = dma.vmem_to_hbm [thread:$0]  (%p760), %s765, %s766, %s762, %s745, 128, 128, 8
        $region68: #{tpu_custom_call.1} parent=47 // pred_fallthru
          _
      $region48: #{tpu_custom_call.1} parent=5 // pred_fallthru
        _
      %p771 = scmp.le.s32.totalorder 2, %s21
      // Predicated region
      $region69: #{tpu_custom_call.1} parent=5 // pred_check
        %p772 = pneg %p771
      $region70: #{tpu_custom_call.1} parent=5 // pred_check_branch
        %774 = sbr.rel (%p772) target = $region72
      $region71: #{tpu_custom_call.1} parent=5 // pred_region
        %s775 = ssub.s32 %s21, 2
        // Predicated region
        $region73: #{tpu_custom_call.1} parent=71 // pred_check
          %p776 = pneg %p202
        $region74: #{tpu_custom_call.1} parent=71 // pred_check_branch
          %778 = sbr.rel (%p776) target = $region76
        $region75: #{tpu_custom_call.1} parent=71 // pred_region
          %s779 = sand.u32 %s187, 1
          %s780 = scalar_lea.sflag [#allocation4], %s779
          %s781 = sand.u32 %s187, 1
          %s782 = smul.addr %s781, 32
          %s783 = scalar_lea.vmem [#allocation10], %s782
          %784 = dma.done %s780, 512
        $region76: #{tpu_custom_call.1} parent=71 // pred_fallthru
          _
      $region72: #{tpu_custom_call.1} parent=5 // pred_fallthru
        _
    $region6: #{tpu_custom_call.1} parent=1 // loop_footer
      %s25 = sadd.s32 1, %s21
    $region7: #{tpu_custom_call.1} parent=1 // loop_footer_branch
      %20 = sbr.rel target = $region3
    $region8: #{tpu_custom_call.1} parent=1 // loop_exit
      _
    %785 = vsyncpa [#allocation3], 1
    %s786 = scalar_lea.sflag [#allocation3], 1
    %787 = vsyncpa %s786, 1
    %788 = vsyncpa [#allocation6], 1
    %789 = vsyncpa [#allocation9], 1
    %790 = vsyncpa [#allocation4], 1
    %s791 = scalar_lea.sflag [#allocation4], 1
    %792 = vsyncpa %s791, 1

</llo_original>
